<compile_context>
chip_gen: v7x
topology: tpu7x:2x2x1
jax: 0.10.0
libtpu: 0.0.40
codegen_flags: <defaults>
</compile_context>

<pallas_src>
from functools import partial

import jax
import jax.numpy as jnp
from jax.experimental import pallas as pl
from jax.experimental.pallas import tpu as pltpu

EPS1 = 0.05
EPS2 = 0.01
OUT_HW = 7


def _vmem_budget_bytes():
    """Generation-aware VMEM budget: ~3/4 of physical per-core VMEM."""
    try:
        cap = int(pltpu.get_tpu_info().vmem_capacity_bytes)
    except Exception:
        cap = 64 * 1024 * 1024  # conservative (v7x-sized) default
    return (cap * 3) // 4


_VMEM_BUDGET = _vmem_budget_bytes()


def _pool_onehot(H, W, out_hw=OUT_HW):
    """bf16 (H*W, out_hw*out_hw) 0/1 one-hot pooling matrix + 1/window-area."""
    kh, kw = H // out_hw, W // out_hw
    h_win = jnp.arange(H) // kh
    w_win = jnp.arange(W) // kw
    win = (h_win[:, None] * out_hw + w_win[None, :]).reshape(-1)      # (H*W,)
    onehot = (win[:, None] == jnp.arange(out_hw * out_hw)[None, :])
    return onehot.astype(jnp.bfloat16), 1.0 / float(kh * kw)


# ---------------------------------------------------------------------------
# Fast path: whole problem in VMEM, single fused kernel.
# ---------------------------------------------------------------------------
def _fused_kernel(x_ref, p_ref, w_ref, o_ref, *, inv_area):
    """x_ref: (N, C, HW); p_ref: (4, C, 1) = [g1, b1, g2, b2];
    w_ref: (HW, K) bf16 one-hot; o_ref: (N, C, K) f32."""
    N, C, HW = x_ref.shape
    K = w_ref.shape[1]
    x = x_ref[...].astype(jnp.float32)

    g1, b1, g2, b2 = p_ref[0], p_ref[1], p_ref[2], p_ref[3]   # each (C, 1)
    inv_cnt = 1.0 / float(N * HW)

    # --- BN1: fused single-pass stats (independent sum / sum-of-squares) ---
    m1 = jnp.sum(x, axis=(0, 2), keepdims=True) * inv_cnt          # (1, C, 1)
    ms1 = jnp.sum(x * x, axis=(0, 2), keepdims=True) * inv_cnt
    var1 = ms1 - m1 * m1
    v2 = jax.nn.sigmoid((x - m1) * (g1 * jax.lax.rsqrt(var1 + EPS1)) + b1)

    # --- BN2 ---
    m2 = jnp.sum(v2, axis=(0, 2), keepdims=True) * inv_cnt
    ms2 = jnp.sum(v2 * v2, axis=(0, 2), keepdims=True) * inv_cnt
    var2 = ms2 - m2 * m2
    v4 = jax.nn.sigmoid((v2 - m2) * (g2 * jax.lax.rsqrt(var2 + EPS2)) + b2)

    # --- Adaptive pool as ONE flattened MXU matmul + one contiguous store ---
    w = w_ref[...].astype(jnp.float32)
    res = jnp.dot(v4.reshape(N * C, HW), w,
                  preferred_element_type=jnp.float32) * inv_area
    o_ref[...] = res.reshape(N, C, K)


def _fused_forward(x_flat, g1, b1, g2, b2, H, W, vmem_limit):
    N, C, HW = x_flat.shape
    K = OUT_HW * OUT_HW
    params = jnp.stack([g1, b1, g2, b2], axis=0)[..., None]     # (4, C, 1)
    pool_w, inv_area = _pool_onehot(H, W)
    out = pl.pallas_call(
        partial(_fused_kernel, inv_area=inv_area),
        out_shape=jax.ShapeDtypeStruct((N, C, K), jnp.float32),
        in_specs=[
            pl.BlockSpec(memory_space=pltpu.MemorySpace.VMEM),
            pl.BlockSpec(memory_space=pltpu.MemorySpace.VMEM),
            pl.BlockSpec(memory_space=pltpu.MemorySpace.VMEM),
        ],
        out_specs=pl.BlockSpec(memory_space=pltpu.MemorySpace.VMEM),
        compiler_params=pltpu.CompilerParams(vmem_limit_bytes=int(vmem_limit)),
    )(x_flat, params, pool_w)
    return out.reshape(N, C, OUT_HW, OUT_HW)


# ---------------------------------------------------------------------------
# Tiled multi-pass path: grid over batch, recompute v2 instead of spilling it.
# ---------------------------------------------------------------------------
def _stats_kernel(x_ref, sum_ref, sumsq_ref):
    """Accumulate per-channel sum / sumsq of x over the batch grid."""
    @pl.when(pl.program_id(0) == 0)
    def _():
        sum_ref[...] = jnp.zeros_like(sum_ref)
        sumsq_ref[...] = jnp.zeros_like(sumsq_ref)

    x = x_ref[...].astype(jnp.float32)
    sum_ref[...] += jnp.sum(x, axis=(0, 2), keepdims=True)
    sumsq_ref[...] += jnp.sum(x * x, axis=(0, 2), keepdims=True)


def _v2_stats_kernel(x_ref, p_ref, sum_ref, sumsq_ref):
    """Recompute v2 = sigmoid(x*scale1+shift1) and accumulate its stats."""
    @pl.when(pl.program_id(0) == 0)
    def _():
        sum_ref[...] = jnp.zeros_like(sum_ref)
        sumsq_ref[...] = jnp.zeros_like(sumsq_ref)

    x = x_ref[...].astype(jnp.float32)
    v2 = jax.nn.sigmoid(x * p_ref[0] + p_ref[1])
    sum_ref[...] += jnp.sum(v2, axis=(0, 2), keepdims=True)
    sumsq_ref[...] += jnp.sum(v2 * v2, axis=(0, 2), keepdims=True)


def _final_kernel(x_ref, p_ref, w_ref, o_ref, *, inv_area):
    """Recompute v2, apply BN2+sigmoid, pool via one flattened MXU matmul."""
    TB, C, HW = x_ref.shape
    K = w_ref.shape[1]
    x = x_ref[...].astype(jnp.float32)
    v2 = jax.nn.sigmoid(x * p_ref[0] + p_ref[1])
    v4 = jax.nn.sigmoid(v2 * p_ref[2] + p_ref[3])
    w = w_ref[...].astype(jnp.float32)
    res = jnp.dot(v4.reshape(TB * C, HW), w,
                  preferred_element_type=jnp.float32) * inv_area
    o_ref[...] = res.reshape(TB, C, K)


def _pick_batch_tile(N, per_sample_bytes, pool_w_bytes, budget):
    """Largest divisor of N whose per-step footprint fits the budget (0 if none)."""
    best = 0
    for tb in range(1, N + 1):
        if N % tb:
            continue
        need = 6 * tb * per_sample_bytes + pool_w_bytes + (2 << 20)
        if need <= budget:
            best = tb
        else:
            break
    return best


def _tiled_forward(x_flat, g1, b1, g2, b2, H, W, tb, vmem_limit):
    """3-pass Pallas path for inputs too large for the single fused kernel."""
    N, C, HW = x_flat.shape
    K = OUT_HW * OUT_HW
    nb = N // tb
    pool_w, inv_area = _pool_onehot(H, W)
    cnt = float(N * HW)
    vmem_limit = int(vmem_limit)

    stat_shape = (jax.ShapeDtypeStruct((1, C, 1), jnp.float32),
                  jax.ShapeDtypeStruct((1, C, 1), jnp.float32))
    stat_specs = (pl.BlockSpec((1, C, 1), lambda i: (0, 0, 0)),
                  pl.BlockSpec((1, C, 1), lambda i: (0, 0, 0)))
    x_spec = pl.BlockSpec((tb, C, HW), lambda i: (i, 0, 0))

    # --- pass 1: per-channel stats of x -----------------------------------
    s1, ss1 = pl.pallas_call(
        _stats_kernel,
        out_shape=stat_shape,
        grid=(nb,),
        in_specs=[x_spec],
        out_specs=stat_specs,
        compiler_params=pltpu.CompilerParams(
            dimension_semantics=("arbitrary",), vmem_limit_bytes=vmem_limit),
    )(x_flat)

    m1 = s1 / cnt
    var1 = ss1 / cnt - m1 * m1
    sc1 = g1.reshape(1, C, 1) * jax.lax.rsqrt(var1 + EPS1)
    sh1 = b1.reshape(1, C, 1) - m1 * sc1
    p2 = jnp.concatenate([sc1, sh1], axis=0)                    # (2, C, 1)

    # --- pass 2: per-channel stats of v2 (recomputed from x) --------------
    s2, ss2 = pl.pallas_call(
        _v2_stats_kernel,
        out_shape=stat_shape,
        grid=(nb,),
        in_specs=[x_spec, pl.BlockSpec((2, C, 1), lambda i: (0, 0, 0))],
        out_specs=stat_specs,
        compiler_params=pltpu.CompilerParams(
            dimension_semantics=("arbitrary",), vmem_limit_bytes=vmem_limit),
    )(x_flat, p2)

    m2 = s2 / cnt
    var2 = ss2 / cnt - m2 * m2
    sc2 = g2.reshape(1, C, 1) * jax.lax.rsqrt(var2 + EPS2)
    sh2 = b2.reshape(1, C, 1) - m2 * sc2
    p4 = jnp.concatenate([sc1, sh1, sc2, sh2], axis=0)          # (4, C, 1)

    # --- pass 3: normalize + sigmoid + pool, per batch tile ("parallel") ---
    out = pl.pallas_call(
        partial(_final_kernel, inv_area=inv_area),
        out_shape=jax.ShapeDtypeStruct((N, C, K), jnp.float32),
        grid=(nb,),
        in_specs=[x_spec,
                  pl.BlockSpec((4, C, 1), lambda i: (0, 0, 0)),
                  pl.BlockSpec((HW, K), lambda i: (0, 0))],
        out_specs=pl.BlockSpec((tb, C, K), lambda i: (i, 0, 0)),
        compiler_params=pltpu.CompilerParams(
            dimension_semantics=("parallel",), vmem_limit_bytes=vmem_limit),
    )(x_flat, p4, pool_w)

    return out.reshape(N, C, OUT_HW, OUT_HW)


# ---------------------------------------------------------------------------
# Top-level forward + plain-JAX reference.
# ---------------------------------------------------------------------------
@jax.jit
def model_forward(x_nchw, gamma1, beta1, gamma2, beta2):
    """x_nchw: (N, C, H, W).  Returns (N, C, 7, 7) float32."""
    N, C, H, W = x_nchw.shape
    assert H % OUT_HW == 0 and W % OUT_HW == 0
    HW = H * W
    K = OUT_HW * OUT_HW

    g1 = gamma1[:C].astype(jnp.float32)
    b1 = beta1[:C].astype(jnp.float32)
    g2 = gamma2[:C].astype(jnp.float32)
    b2 = beta2[:C].astype(jnp.float32)

    # Free reshape (no transpose); dtype kept (bf16 input stays bf16 over DMA,
    # kernels upcast to f32 for stats / normalization).
    x_flat = x_nchw.reshape(N, C, HW)

    in_bytes = N * C * HW * x_nchw.dtype.itemsize
    pool_w_bytes = HW * K * 2
    est_fast = in_bytes + 2 * N * C * HW * 4 + pool_w_bytes + N * C * K * 4 + (2 << 20)

    if est_fast <= _VMEM_BUDGET:
        return _fused_forward(x_flat, g1, b1, g2, b2, H, W, _VMEM_BUDGET)

    per_sample = C * HW * 4
    tb = _pick_batch_tile(N, per_sample, pool_w_bytes, _VMEM_BUDGET)
    if tb > 0:
        return _tiled_forward(x_flat, g1, b1, g2, b2, H, W, tb, _VMEM_BUDGET)

    # TODO(synk): add a spatially-tiled variant for single samples whose
    # (C, H*W) slab alone exceeds the VMEM budget; fall back to plain JAX.
    return reference_forward(x_nchw, gamma1, beta1, gamma2, beta2)


def reference_forward(x_nchw, gamma1, beta1, gamma2, beta2):
    """Plain-JAX reference (NCHW) for validation / extreme-size fallback."""
    C = x_nchw.shape[1]
    x = x_nchw.astype(jnp.float32)

    def bn(x, g, b, eps):
        m = jnp.mean(x, axis=(0, 2, 3), keepdims=True)
        v = jnp.mean((x - m) ** 2, axis=(0, 2, 3), keepdims=True)
        return (x - m) / jnp.sqrt(v + eps) * g[None, :, None, None] + b[None, :, None, None]

    v2 = jax.nn.sigmoid(bn(x, gamma1[:C], beta1[:C], EPS1))
    v4 = jax.nn.sigmoid(bn(v2, gamma2[:C], beta2[:C], EPS2))
    N, C, H, W = v4.shape
    v5 = v4.reshape(N, C, OUT_HW, H // OUT_HW, OUT_HW, W // OUT_HW).mean(axis=(3, 5))
    return v5


if __name__ == "__main__":
    key = jax.random.PRNGKey(0)
    k_x, k_g1, k_b1, k_g2, k_b2 = jax.random.split(key, 5)

    # Small shapes consistent with the forward pass: 32 channels (second BN),
    # batch=2, spatial 14x14 so the adaptive pool actually pools (2x2 windows).
    x = jax.random.normal(k_x, (2, 32, 14, 14), dtype=jnp.float32)

    # Affine params (shapes from __init__: 64 and 32 features).
    gamma1 = 1.0 + 0.1 * jax.random.normal(k_g1, (64,), dtype=jnp.float32)
    beta1 = 0.1 * jax.random.normal(k_b1, (64,), dtype=jnp.float32)
    gamma2 = 1.0 + 0.1 * jax.random.normal(k_g2, (32,), dtype=jnp.float32)
    beta2 = 0.1 * jax.random.normal(k_b2, (32,), dtype=jnp.float32)

    ref = reference_forward(x, gamma1, beta1, gamma2, beta2)

    # Fast single-pass fused kernel.
    out = jax.block_until_ready(model_forward(x, gamma1, beta1, gamma2, beta2))
    assert out.shape == (2, 32, 7, 7), out.shape
    assert jnp.allclose(out, ref, rtol=3e-3, atol=3e-3), \
        float(jnp.max(jnp.abs(out - ref)))

    # Also exercise the tiled multi-pass path (forced, batch tile = 1).
    N, C, H, W = x.shape
    out_t = _tiled_forward(x.reshape(N, C, H * W),
                           gamma1[:C], beta1[:C], gamma2, beta2,
                           H, W, 1, _VMEM_BUDGET)
    out_t = jax.block_until_ready(out_t)
    assert jnp.allclose(out_t, ref, rtol=3e-3, atol=3e-3), \
        float(jnp.max(jnp.abs(out_t - ref)))

    print("KERNEL_OK")
</pallas_src>

<mosaic_0001>
module attributes {stable_mosaic.version = 11 : i64} {
  func.func @_fused_kernel(%arg0: memref<2x32x196xf32, #tpu.memory_space<vmem>>, %arg1: memref<4x32x1xf32, #tpu.memory_space<vmem>>, %arg2: memref<196x49xbf16, #tpu.memory_space<vmem>>, %arg3: memref<2x32x49xf32, #tpu.memory_space<vmem>>) attributes {dimension_semantics = [], scalar_prefetch = 0 : i64, scratch_operands = 0 : i64, tpu.core_type = #tpu.core_type<tc>} {
    %c0 = arith.constant 0 : index
    %c0_0 = arith.constant 0 : index
    %c0_1 = arith.constant 0 : index
    %0 = vector.load %arg0[%c0, %c0_0, %c0_1] : memref<2x32x196xf32, #tpu.memory_space<vmem>>, vector<2x32x196xf32>
    %c0_2 = arith.constant 0 : index
    %c0_3 = arith.constant 0 : index
    %c0_4 = arith.constant 0 : index
    %1 = vector.load %arg1[%c0_2, %c0_3, %c0_4] : memref<4x32x1xf32, #tpu.memory_space<vmem>>, vector<1x32x1xf32>
    %2 = vector.shape_cast %1 : vector<1x32x1xf32> to vector<32x1xf32>
    %c1 = arith.constant 1 : index
    %c0_5 = arith.constant 0 : index
    %c0_6 = arith.constant 0 : index
    %3 = vector.load %arg1[%c1, %c0_5, %c0_6] : memref<4x32x1xf32, #tpu.memory_space<vmem>>, vector<1x32x1xf32>
    %4 = vector.shape_cast %3 : vector<1x32x1xf32> to vector<32x1xf32>
    %c2 = arith.constant 2 : index
    %c0_7 = arith.constant 0 : index
    %c0_8 = arith.constant 0 : index
    %5 = vector.load %arg1[%c2, %c0_7, %c0_8] : memref<4x32x1xf32, #tpu.memory_space<vmem>>, vector<1x32x1xf32>
    %6 = vector.shape_cast %5 : vector<1x32x1xf32> to vector<32x1xf32>
    %c3 = arith.constant 3 : index
    %c0_9 = arith.constant 0 : index
    %c0_10 = arith.constant 0 : index
    %7 = vector.load %arg1[%c3, %c0_9, %c0_10] : memref<4x32x1xf32, #tpu.memory_space<vmem>>, vector<1x32x1xf32>
    %8 = vector.shape_cast %7 : vector<1x32x1xf32> to vector<32x1xf32>
    %cst = arith.constant dense<0.000000e+00> : vector<32xf32>
    %9 = vector.multi_reduction <add>, %0, %cst [0, 2] : vector<2x32x196xf32> to vector<32xf32>
    %10 = vector.shape_cast %9 : vector<32xf32> to vector<1x32x1xf32>
    %cst_11 = arith.constant 0.00255102036 : f32
    %11 = vector.broadcast %cst_11 : f32 to vector<1x32x1xf32>
    %12 = arith.mulf %10, %11 : vector<1x32x1xf32>
    %13 = arith.mulf %0, %0 : vector<2x32x196xf32>
    %cst_12 = arith.constant dense<0.000000e+00> : vector<32xf32>
    %14 = vector.multi_reduction <add>, %13, %cst_12 [0, 2] : vector<2x32x196xf32> to vector<32xf32>
    %15 = vector.shape_cast %14 : vector<32xf32> to vector<1x32x1xf32>
    %cst_13 = arith.constant 0.00255102036 : f32
    %16 = vector.broadcast %cst_13 : f32 to vector<1x32x1xf32>
    %17 = arith.mulf %15, %16 : vector<1x32x1xf32>
    %18 = arith.mulf %12, %12 : vector<1x32x1xf32>
    %19 = arith.subf %17, %18 : vector<1x32x1xf32>
    %20 = vector.broadcast %12 : vector<1x32x1xf32> to vector<2x32x196xf32>
    %21 = arith.subf %0, %20 : vector<2x32x196xf32>
    %cst_14 = arith.constant 5.000000e-02 : f32
    %22 = vector.broadcast %cst_14 : f32 to vector<1x32x1xf32>
    %23 = arith.addf %19, %22 : vector<1x32x1xf32>
    %24 = math.rsqrt %23 : vector<1x32x1xf32>
    %25 = vector.shape_cast %2 : vector<32x1xf32> to vector<1x32x1xf32>
    %26 = arith.mulf %25, %24 : vector<1x32x1xf32>
    %27 = vector.broadcast %26 : vector<1x32x1xf32> to vector<2x32x196xf32>
    %28 = arith.mulf %21, %27 : vector<2x32x196xf32>
    %29 = vector.shape_cast %4 : vector<32x1xf32> to vector<1x32x1xf32>
    %30 = vector.broadcast %29 : vector<1x32x1xf32> to vector<2x32x196xf32>
    %31 = arith.addf %28, %30 : vector<2x32x196xf32>
    %32 = arith.negf %31 : vector<2x32x196xf32>
    %33 = math.exp %32 : vector<2x32x196xf32>
    %cst_15 = arith.constant 1.000000e+00 : f32
    %34 = vector.broadcast %cst_15 : f32 to vector<2x32x196xf32>
    %35 = arith.addf %34, %33 : vector<2x32x196xf32>
    %36 = arith.divf %34, %35 : vector<2x32x196xf32>
    %cst_16 = arith.constant dense<0.000000e+00> : vector<32xf32>
    %37 = vector.multi_reduction <add>, %36, %cst_16 [0, 2] : vector<2x32x196xf32> to vector<32xf32>
    %38 = vector.shape_cast %37 : vector<32xf32> to vector<1x32x1xf32>
    %cst_17 = arith.constant 0.00255102036 : f32
    %39 = vector.broadcast %cst_17 : f32 to vector<1x32x1xf32>
    %40 = arith.mulf %38, %39 : vector<1x32x1xf32>
    %41 = arith.mulf %36, %36 : vector<2x32x196xf32>
    %cst_18 = arith.constant dense<0.000000e+00> : vector<32xf32>
    %42 = vector.multi_reduction <add>, %41, %cst_18 [0, 2] : vector<2x32x196xf32> to vector<32xf32>
    %43 = vector.shape_cast %42 : vector<32xf32> to vector<1x32x1xf32>
    %cst_19 = arith.constant 0.00255102036 : f32
    %44 = vector.broadcast %cst_19 : f32 to vector<1x32x1xf32>
    %45 = arith.mulf %43, %44 : vector<1x32x1xf32>
    %46 = arith.mulf %40, %40 : vector<1x32x1xf32>
    %47 = arith.subf %45, %46 : vector<1x32x1xf32>
    %48 = vector.broadcast %40 : vector<1x32x1xf32> to vector<2x32x196xf32>
    %49 = arith.subf %36, %48 : vector<2x32x196xf32>
    %cst_20 = arith.constant 0.00999999977 : f32
    %50 = vector.broadcast %cst_20 : f32 to vector<1x32x1xf32>
    %51 = arith.addf %47, %50 : vector<1x32x1xf32>
    %52 = math.rsqrt %51 : vector<1x32x1xf32>
    %53 = vector.shape_cast %6 : vector<32x1xf32> to vector<1x32x1xf32>
    %54 = arith.mulf %53, %52 : vector<1x32x1xf32>
    %55 = vector.broadcast %54 : vector<1x32x1xf32> to vector<2x32x196xf32>
    %56 = arith.mulf %49, %55 : vector<2x32x196xf32>
    %57 = vector.shape_cast %8 : vector<32x1xf32> to vector<1x32x1xf32>
    %58 = vector.broadcast %57 : vector<1x32x1xf32> to vector<2x32x196xf32>
    %59 = arith.addf %56, %58 : vector<2x32x196xf32>
    %60 = arith.negf %59 : vector<2x32x196xf32>
    %61 = math.exp %60 : vector<2x32x196xf32>
    %cst_21 = arith.constant 1.000000e+00 : f32
    %62 = vector.broadcast %cst_21 : f32 to vector<2x32x196xf32>
    %63 = arith.addf %62, %61 : vector<2x32x196xf32>
    %64 = arith.divf %62, %63 : vector<2x32x196xf32>
    %c0_22 = arith.constant 0 : index
    %c0_23 = arith.constant 0 : index
    %65 = vector.load %arg2[%c0_22, %c0_23] : memref<196x49xbf16, #tpu.memory_space<vmem>>, vector<196x49xbf16>
    %66 = arith.extf %65 : vector<196x49xbf16> to vector<196x49xf32>
    %67 = vector.shape_cast %64 : vector<2x32x196xf32> to vector<64x196xf32>
    %cst_24 = arith.constant dense<0.000000e+00> : vector<64x49xf32>
    %68 = tpu.matmul %67, %66, %cst_24 {dimension_numbers = #tpu.dot_dimension_numbers<[1], [0], [0], [1], [0, 0, 1, 1], [], []>} : vector<64x196xf32>, vector<196x49xf32>, vector<64x49xf32> -> vector<64x49xf32>
    %cst_25 = arith.constant 2.500000e-01 : f32
    %69 = vector.broadcast %cst_25 : f32 to vector<64x49xf32>
    %70 = arith.mulf %68, %69 : vector<64x49xf32>
    %71 = vector.shape_cast %70 : vector<64x49xf32> to vector<2x32x49xf32>
    %c0_26 = arith.constant 0 : index
    %c0_27 = arith.constant 0 : index
    %c0_28 = arith.constant 0 : index
    %72 = vector.load %arg3[%c0_26, %c0_27, %c0_28] : memref<2x32x49xf32, #tpu.memory_space<vmem>>, vector<2x32x49xf32>
    tpu.vector_store %arg3[%c0_26, %c0_27, %c0_28], %71 {strides = array<i32>} : memref<2x32x49xf32, #tpu.memory_space<vmem>>, vector<2x32x49xf32>,
    return
  }
}

</mosaic_0001>

<llo_original>
// kernel: model_forward.1
$region0: #{model_forward.1}
  #allocation0 [shape = 'u32[]', space=smem, size = 0x4, offset = 0x4, fixed_abs, tag = 'smem constant byte address 0x4 - core index']
  #allocation1 [shape = 'u32[144,128]{1,0:T(1,128)}', space=vmem, size = 0x12000, scoped, tag = 'internal scratch']
  %s0 = inlined_call_operand.vmem [shape: f32[2,32,196], index: 0, kind: input, shape index: {}]
  %s1 = inlined_call_operand.vmem [shape: f32[4,32,1], index: 1, kind: input, shape index: {}]
  %s2 = inlined_call_operand.vmem [shape: bf16[196,49], index: 2, kind: input, shape index: {}]
  %s3 = inlined_call_operand.vmem [shape: f32[2,32,49], index: 3, kind: output, shape index: {}]
  %s4 = sld [smem:[#allocation0]]
  $region22: #{model_forward.1} parent=0
    _
  %s6 = ssub.s32 1, %s4
  %s7 = scalar_select 0, %s6, %s4
  // Predicated region
  $region2: #{model_forward.1} parent=0 // pred_check
    _
  $region3: #{model_forward.1} parent=0 // pred_check_branch
    %9 = sbr.rel (0) target = $region5
  $region4: #{model_forward.1} parent=0 // pred_region
    _
  $region5: #{model_forward.1} parent=0 // pred_fallthru
    _
  // Predicated region
  $region6: #{model_forward.1} parent=0 // pred_check
    _
  $region7: #{model_forward.1} parent=0 // pred_check_branch
    %11 = sbr.rel (0) target = $region9
  $region8: #{model_forward.1} parent=0 // pred_region
    _
  $region9: #{model_forward.1} parent=0 // pred_fallthru
    _
  // Predicated region
  $region10: #{model_forward.1} parent=0 // pred_check
    _
  $region11: #{model_forward.1} parent=0 // pred_check_branch
    %13 = sbr.rel (0) target = $region13
  $region12: #{model_forward.1} parent=0 // pred_region
    _
  $region13: #{model_forward.1} parent=0 // pred_fallthru
    _
  %v14 = vld [vmem:[%s0] sm:$0xff]
  %v15 = vld [vmem:[%s0 + $0x8] sm:$0xff]
  %v16 = vld [vmem:[%s0 + $0x10] sm:$0xff]
  %v17 = vld [vmem:[%s0 + $0x18] sm:$0xff]
  %v18 = vld [vmem:[%s0 + $0x20] sm:$0xff]
  %v19 = vld [vmem:[%s0 + $0x28] sm:$0xff]
  %v20 = vld [vmem:[%s0 + $0x30] sm:$0xff]
  %v21 = vld [vmem:[%s0 + $0x38] sm:$0xff]
  %v22 = vld [vmem:[%s0 + $0x40] sm:$0xff]
  %v23 = vld [vmem:[%s0 + $0x48] sm:$0xff]
  %v24 = vld [vmem:[%s0 + $0x50] sm:$0xff]
  %v25 = vld [vmem:[%s0 + $0x58] sm:$0xff]
  %v26 = vld [vmem:[%s0 + $0x60] sm:$0xff]
  %v27 = vld [vmem:[%s0 + $0x68] sm:$0xff]
  %v28 = vld [vmem:[%s0 + $0x70] sm:$0xff]
  %v29 = vld [vmem:[%s0 + $0x78] sm:$0xff]
  %v30 = vld [vmem:[%s1] sm:$0xff]
  %v31 = vld [vmem:[%s1 + $0x8] sm:$0xff]
  %v32 = vld [vmem:[%s1 + $0x10] sm:$0xff]
  %v33 = vld [vmem:[%s1 + $0x18] sm:$0xff]
  %s34 = scalar_lea.vmem %s1, 32
  %v35 = vld [vmem:[%s34] sm:$0xff]
  %v36 = vld [vmem:[%s34 + $0x8] sm:$0xff]
  %v37 = vld [vmem:[%s34 + $0x10] sm:$0xff]
  %v38 = vld [vmem:[%s34 + $0x18] sm:$0xff]
  %s39 = scalar_lea.vmem %s1, 64
  %v40 = vld [vmem:[%s39] sm:$0xff]
  %v41 = vld [vmem:[%s39 + $0x8] sm:$0xff]
  %v42 = vld [vmem:[%s39 + $0x10] sm:$0xff]
  %v43 = vld [vmem:[%s39 + $0x18] sm:$0xff]
  %s44 = scalar_lea.vmem %s1, 96
  %v45 = vld [vmem:[%s44] sm:$0xff]
  %v46 = vld [vmem:[%s44 + $0x8] sm:$0xff]
  %v47 = vld [vmem:[%s44 + $0x10] sm:$0xff]
  %v48 = vld [vmem:[%s44 + $0x18] sm:$0xff]
  %vm49 = vcmask 556032
  %v50 = vsel %vm49, %v15, 0.0
  %v51 = vadd.f32 %v14, %v50
  %v52 = vadd.f32 %v51, %v22
  %v53 = vsel %vm49, %v23, 0.0
  %v54 = vadd.f32 %v52, %v53
  %55 = vadd.xlane.f32.xlu0 %v54
  %v56 = vpop.xlane.xlu0 %55
  %v57 = vsel %vm49, %v17, 0.0
  %v58 = vadd.f32 %v16, %v57
  %v59 = vadd.f32 %v58, %v24
  %v60 = vsel %vm49, %v25, 0.0
  %v61 = vadd.f32 %v59, %v60
  %62 = vadd.xlane.f32.xlu0 %v61
  %v63 = vpop.xlane.xlu0 %62
  %v64 = vsel %vm49, %v19, 0.0
  %v65 = vadd.f32 %v18, %v64
  %v66 = vadd.f32 %v65, %v26
  %v67 = vsel %vm49, %v27, 0.0
  %v68 = vadd.f32 %v66, %v67
  %69 = vadd.xlane.f32.xlu0 %v68
  %v70 = vpop.xlane.xlu0 %69
  %v71 = vsel %vm49, %v21, 0.0
  %v72 = vadd.f32 %v20, %v71
  %v73 = vadd.f32 %v72, %v28
  %v74 = vsel %vm49, %v29, 0.0
  %v75 = vadd.f32 %v73, %v74
  %76 = vadd.xlane.f32.xlu0 %v75
  %v77 = vpop.xlane.xlu0 %76
  %v78 = vmul.f32 %v56, 0.0025510204
  %v79 = vmul.f32 %v63, 0.0025510204
  %v80 = vmul.f32 %v70, 0.0025510204
  %v81 = vmul.f32 %v77, 0.0025510204
  %v82 = vmul.f32 %v14, %v14
  %v83 = vmul.f32 %v15, %v15
  %v84 = vmul.f32 %v16, %v16
  %v85 = vmul.f32 %v17, %v17
  %v86 = vmul.f32 %v18, %v18
  %v87 = vmul.f32 %v19, %v19
  %v88 = vmul.f32 %v20, %v20
  %v89 = vmul.f32 %v21, %v21
  %v90 = vmul.f32 %v22, %v22
  %v91 = vmul.f32 %v23, %v23
  %v92 = vmul.f32 %v24, %v24
  %v93 = vmul.f32 %v25, %v25
  %v94 = vmul.f32 %v26, %v26
  %v95 = vmul.f32 %v27, %v27
  %v96 = vmul.f32 %v28, %v28
  %v97 = vmul.f32 %v29, %v29
  %v98 = vsel %vm49, %v83, 0.0
  %v99 = vadd.f32 %v82, %v98
  %v100 = vadd.f32 %v99, %v90
  %v101 = vsel %vm49, %v91, 0.0
  %v102 = vadd.f32 %v100, %v101
  %103 = vadd.xlane.f32.xlu0 %v102
  %v104 = vpop.xlane.xlu0 %103
  %v105 = vsel %vm49, %v85, 0.0
  %v106 = vadd.f32 %v84, %v105
  %v107 = vadd.f32 %v106, %v92
  %v108 = vsel %vm49, %v93, 0.0
  %v109 = vadd.f32 %v107, %v108
  %110 = vadd.xlane.f32.xlu0 %v109
  %v111 = vpop.xlane.xlu0 %110
  %v112 = vsel %vm49, %v87, 0.0
  %v113 = vadd.f32 %v86, %v112
  %v114 = vadd.f32 %v113, %v94
  %v115 = vsel %vm49, %v95, 0.0
  %v116 = vadd.f32 %v114, %v115
  %117 = vadd.xlane.f32.xlu0 %v116
  %v118 = vpop.xlane.xlu0 %117
  %v119 = vsel %vm49, %v89, 0.0
  %v120 = vadd.f32 %v88, %v119
  %v121 = vadd.f32 %v120, %v96
  %v122 = vsel %vm49, %v97, 0.0
  %v123 = vadd.f32 %v121, %v122
  %124 = vadd.xlane.f32.xlu0 %v123
  %v125 = vpop.xlane.xlu0 %124
  %v126 = vmul.f32 %v104, 0.0025510204
  %v127 = vmul.f32 %v111, 0.0025510204
  %v128 = vmul.f32 %v118, 0.0025510204
  %v129 = vmul.f32 %v125, 0.0025510204
  %v130 = vmul.f32 %v78, %v78
  %v131 = vmul.f32 %v79, %v79
  %v132 = vmul.f32 %v80, %v80
  %v133 = vmul.f32 %v81, %v81
  %v134 = vsub.f32 %v126, %v130
  %v135 = vsub.f32 %v127, %v131
  %v136 = vsub.f32 %v128, %v132
  %v137 = vsub.f32 %v129, %v133
  %v138 = vsub.f32 %v14, %v78
  %v139 = vsub.f32 %v15, %v78
  %v140 = vsub.f32 %v16, %v79
  %v141 = vsub.f32 %v17, %v79
  %v142 = vsub.f32 %v18, %v80
  %v143 = vsub.f32 %v19, %v80
  %v144 = vsub.f32 %v20, %v81
  %v145 = vsub.f32 %v21, %v81
  %v146 = vsub.f32 %v22, %v78
  %v147 = vsub.f32 %v23, %v78
  %v148 = vsub.f32 %v24, %v79
  %v149 = vsub.f32 %v25, %v79
  %v150 = vsub.f32 %v26, %v80
  %v151 = vsub.f32 %v27, %v80
  %v152 = vsub.f32 %v28, %v81
  %v153 = vsub.f32 %v29, %v81
  %v154 = vadd.f32 %v134, 0.05
  %v155 = vadd.f32 %v135, 0.05
  %v156 = vadd.f32 %v136, 0.05
  %v157 = vadd.f32 %v137, 0.05
  %v158 = vrsqrt.pop %v154
  %v159 = vrsqrt.pop %v155
  %v160 = vrsqrt.pop %v156
  %v161 = vrsqrt.pop %v157
  %v162 = vmul.f32 %v30, %v158
  %v163 = vmul.f32 %v31, %v159
  %v164 = vmul.f32 %v32, %v160
  %v165 = vmul.f32 %v33, %v161
  %167 = vset.pattern.permute.xlu0 0
  %168 = vperm.xlu0 %167, %v162
  %v169 = vpop.permute.xlu0 %168
  %172 = vset.pattern.permute.xlu0 0
  %173 = vperm.xlu0 %172, %v163
  %v174 = vpop.permute.xlu0 %173
  %177 = vset.pattern.permute.xlu0 0
  %178 = vperm.xlu0 %177, %v164
  %v179 = vpop.permute.xlu0 %178
  %182 = vset.pattern.permute.xlu0 0
  %183 = vperm.xlu0 %182, %v165
  %v184 = vpop.permute.xlu0 %183
  %v186 = vmul.f32 %v138, %v169
  %v187 = vmul.f32 %v139, %v169
  %v188 = vmul.f32 %v140, %v174
  %v189 = vmul.f32 %v141, %v174
  %v190 = vmul.f32 %v142, %v179
  %v191 = vmul.f32 %v143, %v179
  %v192 = vmul.f32 %v144, %v184
  %v193 = vmul.f32 %v145, %v184
  %v194 = vmul.f32 %v146, %v169
  %v195 = vmul.f32 %v147, %v169
  %v196 = vmul.f32 %v148, %v174
  %v197 = vmul.f32 %v149, %v174
  %v198 = vmul.f32 %v150, %v179
  %v199 = vmul.f32 %v151, %v179
  %v200 = vmul.f32 %v152, %v184
  %v201 = vmul.f32 %v153, %v184
  %203 = vset.pattern.permute.xlu0 0
  %204 = vperm.xlu0 %203, %v35
  %v205 = vpop.permute.xlu0 %204
  %208 = vset.pattern.permute.xlu0 0
  %209 = vperm.xlu0 %208, %v36
  %v210 = vpop.permute.xlu0 %209
  %213 = vset.pattern.permute.xlu0 0
  %214 = vperm.xlu0 %213, %v37
  %v215 = vpop.permute.xlu0 %214
  %218 = vset.pattern.permute.xlu0 0
  %219 = vperm.xlu0 %218, %v38
  %v220 = vpop.permute.xlu0 %219
  %v222 = vadd.f32 %v186, %v205
  %v223 = vadd.f32 %v187, %v205
  %v224 = vadd.f32 %v188, %v210
  %v225 = vadd.f32 %v189, %v210
  %v226 = vadd.f32 %v190, %v215
  %v227 = vadd.f32 %v191, %v215
  %v228 = vadd.f32 %v192, %v220
  %v229 = vadd.f32 %v193, %v220
  %v230 = vadd.f32 %v194, %v205
  %v231 = vadd.f32 %v195, %v205
  %v232 = vadd.f32 %v196, %v210
  %v233 = vadd.f32 %v197, %v210
  %v234 = vadd.f32 %v198, %v215
  %v235 = vadd.f32 %v199, %v215
  %v236 = vadd.f32 %v200, %v220
  %v237 = vadd.f32 %v201, %v220
  %v238 = vxor.u32 %v222, 2147483648
  %v239 = vxor.u32 %v223, 2147483648
  %v240 = vxor.u32 %v224, 2147483648
  %v241 = vxor.u32 %v225, 2147483648
  %v242 = vxor.u32 %v226, 2147483648
  %v243 = vxor.u32 %v227, 2147483648
  %v244 = vxor.u32 %v228, 2147483648
  %v245 = vxor.u32 %v229, 2147483648
  %v246 = vxor.u32 %v230, 2147483648
  %v247 = vxor.u32 %v231, 2147483648
  %v248 = vxor.u32 %v232, 2147483648
  %v249 = vxor.u32 %v233, 2147483648
  %v250 = vxor.u32 %v234, 2147483648
  %v251 = vxor.u32 %v235, 2147483648
  %v252 = vxor.u32 %v236, 2147483648
  %v253 = vxor.u32 %v237, 2147483648
  %v254 = vmul.f32 %v238, 1.442695
  %v255 = vpow.pop %v254
  %v256 = vmul.f32 %v239, 1.442695
  %v257 = vpow.pop %v256
  %v258 = vmul.f32 %v240, 1.442695
  %v259 = vpow.pop %v258
  %v260 = vmul.f32 %v241, 1.442695
  %v261 = vpow.pop %v260
  %v262 = vmul.f32 %v242, 1.442695
  %v263 = vpow.pop %v262
  %v264 = vmul.f32 %v243, 1.442695
  %v265 = vpow.pop %v264
  %v266 = vmul.f32 %v244, 1.442695
  %v267 = vpow.pop %v266
  %v268 = vmul.f32 %v245, 1.442695
  %v269 = vpow.pop %v268
  %v270 = vmul.f32 %v246, 1.442695
  %v271 = vpow.pop %v270
  %v272 = vmul.f32 %v247, 1.442695
  %v273 = vpow.pop %v272
  %v274 = vmul.f32 %v248, 1.442695
  %v275 = vpow.pop %v274
  %v276 = vmul.f32 %v249, 1.442695
  %v277 = vpow.pop %v276
  %v278 = vmul.f32 %v250, 1.442695
  %v279 = vpow.pop %v278
  %v280 = vmul.f32 %v251, 1.442695
  %v281 = vpow.pop %v280
  %v282 = vmul.f32 %v252, 1.442695
  %v283 = vpow.pop %v282
  %v284 = vmul.f32 %v253, 1.442695
  %v285 = vpow.pop %v284
  %v286 = vadd.f32 %v255, 1.0
  %v287 = vadd.f32 %v257, 1.0
  %v288 = vadd.f32 %v259, 1.0
  %v289 = vadd.f32 %v261, 1.0
  %v290 = vadd.f32 %v263, 1.0
  %v291 = vadd.f32 %v265, 1.0
  %v292 = vadd.f32 %v267, 1.0
  %v293 = vadd.f32 %v269, 1.0
  %v294 = vadd.f32 %v271, 1.0
  %v295 = vadd.f32 %v273, 1.0
  %v296 = vadd.f32 %v275, 1.0
  %v297 = vadd.f32 %v277, 1.0
  %v298 = vadd.f32 %v279, 1.0
  %v299 = vadd.f32 %v281, 1.0
  %v300 = vadd.f32 %v283, 1.0
  %v301 = vadd.f32 %v285, 1.0
  %v302 = vrcp.pop %v286
  %v303 = vmul.f32 1.0, %v302
  %v304 = vrcp.pop %v287
  %v305 = vmul.f32 1.0, %v304
  %v306 = vrcp.pop %v288
  %v307 = vmul.f32 1.0, %v306
  %v308 = vrcp.pop %v289
  %v309 = vmul.f32 1.0, %v308
  %v310 = vrcp.pop %v290
  %v311 = vmul.f32 1.0, %v310
  %v312 = vrcp.pop %v291
  %v313 = vmul.f32 1.0, %v312
  %v314 = vrcp.pop %v292
  %v315 = vmul.f32 1.0, %v314
  %v316 = vrcp.pop %v293
  %v317 = vmul.f32 1.0, %v316
  %v318 = vrcp.pop %v294
  %v319 = vmul.f32 1.0, %v318
  %v320 = vrcp.pop %v295
  %v321 = vmul.f32 1.0, %v320
  %v322 = vrcp.pop %v296
  %v323 = vmul.f32 1.0, %v322
  %v324 = vrcp.pop %v297
  %v325 = vmul.f32 1.0, %v324
  %v326 = vrcp.pop %v298
  %v327 = vmul.f32 1.0, %v326
  %v328 = vrcp.pop %v299
  %v329 = vmul.f32 1.0, %v328
  %v330 = vrcp.pop %v300
  %v331 = vmul.f32 1.0, %v330
  %v332 = vrcp.pop %v301
  %v333 = vmul.f32 1.0, %v332
  %v334 = vsel %vm49, %v305, 0.0
  %v335 = vadd.f32 %v303, %v334
  %v336 = vadd.f32 %v335, %v319
  %v337 = vsel %vm49, %v321, 0.0
  %v338 = vadd.f32 %v336, %v337
  %339 = vadd.xlane.f32.xlu0 %v338
  %v340 = vpop.xlane.xlu0 %339
  %v341 = vsel %vm49, %v309, 0.0
  %v342 = vadd.f32 %v307, %v341
  %v343 = vadd.f32 %v342, %v323
  %v344 = vsel %vm49, %v325, 0.0
  %v345 = vadd.f32 %v343, %v344
  %346 = vadd.xlane.f32.xlu0 %v345
  %v347 = vpop.xlane.xlu0 %346
  %v348 = vsel %vm49, %v313, 0.0
  %v349 = vadd.f32 %v311, %v348
  %v350 = vadd.f32 %v349, %v327
  %v351 = vsel %vm49, %v329, 0.0
  %v352 = vadd.f32 %v350, %v351
  %353 = vadd.xlane.f32.xlu0 %v352
  %v354 = vpop.xlane.xlu0 %353
  %v355 = vsel %vm49, %v317, 0.0
  %v356 = vadd.f32 %v315, %v355
  %v357 = vadd.f32 %v356, %v331
  %v358 = vsel %vm49, %v333, 0.0
  %v359 = vadd.f32 %v357, %v358
  %360 = vadd.xlane.f32.xlu0 %v359
  %v361 = vpop.xlane.xlu0 %360
  %v362 = vmul.f32 %v340, 0.0025510204
  %v363 = vmul.f32 %v347, 0.0025510204
  %v364 = vmul.f32 %v354, 0.0025510204
  %v365 = vmul.f32 %v361, 0.0025510204
  %v366 = vmul.f32 %v303, %v303
  %v367 = vmul.f32 %v305, %v305
  %v368 = vmul.f32 %v307, %v307
  %v369 = vmul.f32 %v309, %v309
  %v370 = vmul.f32 %v311, %v311
  %v371 = vmul.f32 %v313, %v313
  %v372 = vmul.f32 %v315, %v315
  %v373 = vmul.f32 %v317, %v317
  %v374 = vmul.f32 %v319, %v319
  %v375 = vmul.f32 %v321, %v321
  %v376 = vmul.f32 %v323, %v323
  %v377 = vmul.f32 %v325, %v325
  %v378 = vmul.f32 %v327, %v327
  %v379 = vmul.f32 %v329, %v329
  %v380 = vmul.f32 %v331, %v331
  %v381 = vmul.f32 %v333, %v333
  %v382 = vsel %vm49, %v367, 0.0
  %v383 = vadd.f32 %v366, %v382
  %v384 = vadd.f32 %v383, %v374
  %v385 = vsel %vm49, %v375, 0.0
  %v386 = vadd.f32 %v384, %v385
  %387 = vadd.xlane.f32.xlu0 %v386
  %v388 = vpop.xlane.xlu0 %387
  %v389 = vsel %vm49, %v369, 0.0
  %v390 = vadd.f32 %v368, %v389
  %v391 = vadd.f32 %v390, %v376
  %v392 = vsel %vm49, %v377, 0.0
  %v393 = vadd.f32 %v391, %v392
  %394 = vadd.xlane.f32.xlu0 %v393
  %v395 = vpop.xlane.xlu0 %394
  %v396 = vsel %vm49, %v371, 0.0
  %v397 = vadd.f32 %v370, %v396
  %v398 = vadd.f32 %v397, %v378
  %v399 = vsel %vm49, %v379, 0.0
  %v400 = vadd.f32 %v398, %v399
  %401 = vadd.xlane.f32.xlu0 %v400
  %v402 = vpop.xlane.xlu0 %401
  %v403 = vsel %vm49, %v373, 0.0
  %v404 = vadd.f32 %v372, %v403
  %v405 = vadd.f32 %v404, %v380
  %v406 = vsel %vm49, %v381, 0.0
  %v407 = vadd.f32 %v405, %v406
  %408 = vadd.xlane.f32.xlu0 %v407
  %v409 = vpop.xlane.xlu0 %408
  %v410 = vmul.f32 %v388, 0.0025510204
  %v411 = vmul.f32 %v395, 0.0025510204
  %v412 = vmul.f32 %v402, 0.0025510204
  %v413 = vmul.f32 %v409, 0.0025510204
  %v414 = vmul.f32 %v362, %v362
  %v415 = vmul.f32 %v363, %v363
  %v416 = vmul.f32 %v364, %v364
  %v417 = vmul.f32 %v365, %v365
  %v418 = vsub.f32 %v410, %v414
  %v419 = vsub.f32 %v411, %v415
  %v420 = vsub.f32 %v412, %v416
  %v421 = vsub.f32 %v413, %v417
  %v422 = vsub.f32 %v303, %v362
  %v423 = vsub.f32 %v305, %v362
  %v424 = vsub.f32 %v307, %v363
  %v425 = vsub.f32 %v309, %v363
  %v426 = vsub.f32 %v311, %v364
  %v427 = vsub.f32 %v313, %v364
  %v428 = vsub.f32 %v315, %v365
  %v429 = vsub.f32 %v317, %v365
  %v430 = vsub.f32 %v319, %v362
  %v431 = vsub.f32 %v321, %v362
  %v432 = vsub.f32 %v323, %v363
  %v433 = vsub.f32 %v325, %v363
  %v434 = vsub.f32 %v327, %v364
  %v435 = vsub.f32 %v329, %v364
  %v436 = vsub.f32 %v331, %v365
  %v437 = vsub.f32 %v333, %v365
  %v438 = vadd.f32 %v418, 0.01
  %v439 = vadd.f32 %v419, 0.01
  %v440 = vadd.f32 %v420, 0.01
  %v441 = vadd.f32 %v421, 0.01
  %v442 = vrsqrt.pop %v438
  %v443 = vrsqrt.pop %v439
  %v444 = vrsqrt.pop %v440
  %v445 = vrsqrt.pop %v441
  %v446 = vmul.f32 %v40, %v442
  %v447 = vmul.f32 %v41, %v443
  %v448 = vmul.f32 %v42, %v444
  %v449 = vmul.f32 %v43, %v445
  %451 = vset.pattern.permute.xlu0 0
  %452 = vperm.xlu0 %451, %v446
  %v453 = vpop.permute.xlu0 %452
  %456 = vset.pattern.permute.xlu0 0
  %457 = vperm.xlu0 %456, %v447
  %v458 = vpop.permute.xlu0 %457
  %461 = vset.pattern.permute.xlu0 0
  %462 = vperm.xlu0 %461, %v448
  %v463 = vpop.permute.xlu0 %462
  %466 = vset.pattern.permute.xlu0 0
  %467 = vperm.xlu0 %466, %v449
  %v468 = vpop.permute.xlu0 %467
  %v470 = vmul.f32 %v422, %v453
  %v471 = vmul.f32 %v423, %v453
  %v472 = vmul.f32 %v424, %v458
  %v473 = vmul.f32 %v425, %v458
  %v474 = vmul.f32 %v426, %v463
  %v475 = vmul.f32 %v427, %v463
  %v476 = vmul.f32 %v428, %v468
  %v477 = vmul.f32 %v429, %v468
  %v478 = vmul.f32 %v430, %v453
  %v479 = vmul.f32 %v431, %v453
  %v480 = vmul.f32 %v432, %v458
  %v481 = vmul.f32 %v433, %v458
  %v482 = vmul.f32 %v434, %v463
  %v483 = vmul.f32 %v435, %v463
  %v484 = vmul.f32 %v436, %v468
  %v485 = vmul.f32 %v437, %v468
  %487 = vset.pattern.permute.xlu0 0
  %488 = vperm.xlu0 %487, %v45
  %v489 = vpop.permute.xlu0 %488
  %492 = vset.pattern.permute.xlu0 0
  %493 = vperm.xlu0 %492, %v46
  %v494 = vpop.permute.xlu0 %493
  %497 = vset.pattern.permute.xlu0 0
  %498 = vperm.xlu0 %497, %v47
  %v499 = vpop.permute.xlu0 %498
  %502 = vset.pattern.permute.xlu0 0
  %503 = vperm.xlu0 %502, %v48
  %v504 = vpop.permute.xlu0 %503
  %v506 = vadd.f32 %v470, %v489
  %v507 = vadd.f32 %v471, %v489
  %v508 = vadd.f32 %v472, %v494
  %v509 = vadd.f32 %v473, %v494
  %v510 = vadd.f32 %v474, %v499
  %v511 = vadd.f32 %v475, %v499
  %v512 = vadd.f32 %v476, %v504
  %v513 = vadd.f32 %v477, %v504
  %v514 = vadd.f32 %v478, %v489
  %v515 = vadd.f32 %v479, %v489
  %v516 = vadd.f32 %v480, %v494
  %v517 = vadd.f32 %v481, %v494
  %v518 = vadd.f32 %v482, %v499
  %v519 = vadd.f32 %v483, %v499
  %v520 = vadd.f32 %v484, %v504
  %v521 = vadd.f32 %v485, %v504
  %v522 = vxor.u32 %v506, 2147483648
  %v523 = vxor.u32 %v507, 2147483648
  %v524 = vxor.u32 %v508, 2147483648
  %v525 = vxor.u32 %v509, 2147483648
  %v526 = vxor.u32 %v510, 2147483648
  %v527 = vxor.u32 %v511, 2147483648
  %v528 = vxor.u32 %v512, 2147483648
  %v529 = vxor.u32 %v513, 2147483648
  %v530 = vxor.u32 %v514, 2147483648
  %v531 = vxor.u32 %v515, 2147483648
  %v532 = vxor.u32 %v516, 2147483648
  %v533 = vxor.u32 %v517, 2147483648
  %v534 = vxor.u32 %v518, 2147483648
  %v535 = vxor.u32 %v519, 2147483648
  %v536 = vxor.u32 %v520, 2147483648
  %v537 = vxor.u32 %v521, 2147483648
  %v538 = vmul.f32 %v522, 1.442695
  %v539 = vpow.pop %v538
  %v540 = vmul.f32 %v523, 1.442695
  %v541 = vpow.pop %v540
  %v542 = vmul.f32 %v524, 1.442695
  %v543 = vpow.pop %v542
  %v544 = vmul.f32 %v525, 1.442695
  %v545 = vpow.pop %v544
  %v546 = vmul.f32 %v526, 1.442695
  %v547 = vpow.pop %v546
  %v548 = vmul.f32 %v527, 1.442695
  %v549 = vpow.pop %v548
  %v550 = vmul.f32 %v528, 1.442695
  %v551 = vpow.pop %v550
  %v552 = vmul.f32 %v529, 1.442695
  %v553 = vpow.pop %v552
  %v554 = vmul.f32 %v530, 1.442695
  %v555 = vpow.pop %v554
  %v556 = vmul.f32 %v531, 1.442695
  %v557 = vpow.pop %v556
  %v558 = vmul.f32 %v532, 1.442695
  %v559 = vpow.pop %v558
  %v560 = vmul.f32 %v533, 1.442695
  %v561 = vpow.pop %v560
  %v562 = vmul.f32 %v534, 1.442695
  %v563 = vpow.pop %v562
  %v564 = vmul.f32 %v535, 1.442695
  %v565 = vpow.pop %v564
  %v566 = vmul.f32 %v536, 1.442695
  %v567 = vpow.pop %v566
  %v568 = vmul.f32 %v537, 1.442695
  %v569 = vpow.pop %v568
  %v570 = vadd.f32 %v539, 1.0
  %v571 = vadd.f32 %v541, 1.0
  %v572 = vadd.f32 %v543, 1.0
  %v573 = vadd.f32 %v545, 1.0
  %v574 = vadd.f32 %v547, 1.0
  %v575 = vadd.f32 %v549, 1.0
  %v576 = vadd.f32 %v551, 1.0
  %v577 = vadd.f32 %v553, 1.0
  %v578 = vadd.f32 %v555, 1.0
  %v579 = vadd.f32 %v557, 1.0
  %v580 = vadd.f32 %v559, 1.0
  %v581 = vadd.f32 %v561, 1.0
  %v582 = vadd.f32 %v563, 1.0
  %v583 = vadd.f32 %v565, 1.0
  %v584 = vadd.f32 %v567, 1.0
  %v585 = vadd.f32 %v569, 1.0
  %v586 = vrcp.pop %v570
  %v587 = vmul.f32 1.0, %v586
  %v588 = vrcp.pop %v571
  %v589 = vmul.f32 1.0, %v588
  %v590 = vrcp.pop %v572
  %v591 = vmul.f32 1.0, %v590
  %v592 = vrcp.pop %v573
  %v593 = vmul.f32 1.0, %v592
  %v594 = vrcp.pop %v574
  %v595 = vmul.f32 1.0, %v594
  %v596 = vrcp.pop %v575
  %v597 = vmul.f32 1.0, %v596
  %v598 = vrcp.pop %v576
  %v599 = vmul.f32 1.0, %v598
  %v600 = vrcp.pop %v577
  %v601 = vmul.f32 1.0, %v600
  %v602 = vrcp.pop %v578
  %v603 = vmul.f32 1.0, %v602
  %v604 = vrcp.pop %v579
  %v605 = vmul.f32 1.0, %v604
  %v606 = vrcp.pop %v580
  %v607 = vmul.f32 1.0, %v606
  %v608 = vrcp.pop %v581
  %v609 = vmul.f32 1.0, %v608
  %v610 = vrcp.pop %v582
  %v611 = vmul.f32 1.0, %v610
  %v612 = vrcp.pop %v583
  %v613 = vmul.f32 1.0, %v612
  %v614 = vrcp.pop %v584
  %v615 = vmul.f32 1.0, %v614
  %v616 = vrcp.pop %v585
  %v617 = vmul.f32 1.0, %v616
  %v618 = vld [vmem:[%s2] sm:$0xf]
  %v619 = vld [vmem:[%s2 + $0x4] sm:$0xf]
  %v620 = vld [vmem:[%s2 + $0x8] sm:$0xf]
  %v621 = vld [vmem:[%s2 + $0xc] sm:$0xf]
  %v622 = vld [vmem:[%s2 + $0x10] sm:$0xf]
  %v623 = vld [vmem:[%s2 + $0x14] sm:$0xf]
  %v624 = vld [vmem:[%s2 + $0x18] sm:$0xf]
  %v625 = vld [vmem:[%s2 + $0x1c] sm:$0xf]
  %v626 = vld [vmem:[%s2 + $0x20] sm:$0xf]
  %v627 = vld [vmem:[%s2 + $0x24] sm:$0xf]
  %v628 = vld [vmem:[%s2 + $0x28] sm:$0xf]
  %v629 = vld [vmem:[%s2 + $0x2c] sm:$0xf]
  %v630 = vld [vmem:[%s2 + $0x30] sm:$0xf]
  %v631 = vld [vmem:[%s2 + $0x34] sm:$0xf]
  %v632 = vld [vmem:[%s2 + $0x38] sm:$0xf]
  %v633 = vld [vmem:[%s2 + $0x3c] sm:$0xf]
  %v634 = vld [vmem:[%s2 + $0x40] sm:$0xf]
  %v635 = vld [vmem:[%s2 + $0x44] sm:$0xf]
  %v636 = vld [vmem:[%s2 + $0x48] sm:$0xf]
  %v637 = vld [vmem:[%s2 + $0x4c] sm:$0xf]
  %v638 = vld [vmem:[%s2 + $0x50] sm:$0xf]
  %v639 = vld [vmem:[%s2 + $0x54] sm:$0xf]
  %v640 = vld [vmem:[%s2 + $0x58] sm:$0xf]
  %v641 = vld [vmem:[%s2 + $0x5c] sm:$0xf]
  %v642 = vld [vmem:[%s2 + $0x60] sm:$0x3]
  %v643 = vunpack.c.l.bf16 %v618
  %v644 = vunpack.c.l.bf16 %v619
  %v645 = vunpack.c.l.bf16 %v620
  %v646 = vunpack.c.l.bf16 %v621
  %v647 = vunpack.c.l.bf16 %v622
  %v648 = vunpack.c.l.bf16 %v623
  %v649 = vunpack.c.l.bf16 %v624
  %v650 = vunpack.c.l.bf16 %v625
  %v651 = vunpack.c.l.bf16 %v626
  %v652 = vunpack.c.l.bf16 %v627
  %v653 = vunpack.c.l.bf16 %v628
  %v654 = vunpack.c.l.bf16 %v629
  %v655 = vunpack.c.l.bf16 %v630
  %v656 = vunpack.c.l.bf16 %v631
  %v657 = vunpack.c.l.bf16 %v632
  %v658 = vunpack.c.l.bf16 %v633
  %v659 = vunpack.c.l.bf16 %v634
  %v660 = vunpack.c.l.bf16 %v635
  %v661 = vunpack.c.l.bf16 %v636
  %v662 = vunpack.c.l.bf16 %v637
  %v663 = vunpack.c.l.bf16 %v638
  %v664 = vunpack.c.l.bf16 %v639
  %v665 = vunpack.c.l.bf16 %v640
  %v666 = vunpack.c.l.bf16 %v641
  %v667 = vunpack.c.l.bf16 %v642
  %v669 = vsel %vm49, %v589, 0
  %v672 = vsel %vm49, %v593, 0
  %v675 = vsel %vm49, %v597, 0
  %v678 = vsel %vm49, %v601, 0
  %v681 = vsel %vm49, %v605, 0
  %v684 = vsel %vm49, %v609, 0
  %v687 = vsel %vm49, %v613, 0
  %v690 = vsel %vm49, %v617, 0
  %vm692 = vcmask 1043456
  %v694 = vsel %vm692, %v667, 0
  %696 = vmatprep.subr.mxu0 0.0
  %697 = vmatpush1.msra.mxu0 %v643
  %698 = vmatprep.subr.mxu0 0.0
  %699 = vmatpush1.msra.mxu0 %v644
  %700 = vmatprep.subr.mxu0 0.0
  %701 = vmatpush1.msra.mxu0 %v645
  %702 = vmatprep.subr.mxu0 0.0
  %703 = vmatpush1.msra.mxu0 %v646
  %704 = vmatprep.subr.mxu0 0.0
  %705 = vmatpush1.msra.mxu0 %v647
  %706 = vmatprep.subr.mxu0 0.0
  %707 = vmatpush1.msra.mxu0 %v648
  %708 = vmatprep.subr.mxu0 0.0
  %709 = vmatpush1.msra.mxu0 %v649
  %710 = vmatprep.subr.mxu0 0.0
  %711 = vmatpush1.msra.mxu0 %v650
  %712 = vmatprep.subr.mxu0 0.0
  %713 = vmatpush1.msra.mxu0 %v651
  %714 = vmatprep.subr.mxu0 0.0
  %715 = vmatpush1.msra.mxu0 %v652
  %716 = vmatprep.subr.mxu0 0.0
  %717 = vmatpush1.msra.mxu0 %v653
  %718 = vmatprep.subr.mxu0 0.0
  %719 = vmatpush1.msra.mxu0 %v654
  %720 = vmatprep.subr.mxu0 0.0
  %721 = vmatpush1.msra.mxu0 %v655
  %722 = vmatprep.subr.mxu0 0.0
  %723 = vmatpush1.msra.mxu0 %v656
  %724 = vmatprep.subr.mxu0 0.0
  %725 = vmatpush1.msra.mxu0 %v657
  %726 = vmatprep.subr.mxu0 0.0
  %727 = vmatpush1.msra.mxu0 %v658
  %728 = vmatprep.subr.mxu0 0.0
  %729 = vmatpush1.msra.mxu0 %v659
  %730 = vmatprep.subr.mxu0 0.0
  %731 = vmatpush1.msra.mxu0 %v660
  %732 = vmatprep.subr.mxu0 0.0
  %733 = vmatpush1.msra.mxu0 %v661
  %734 = vmatprep.subr.mxu0 0.0
  %735 = vmatpush1.msra.mxu0 %v662
  %736 = vmatprep.subr.mxu0 0.0
  %737 = vmatpush1.msra.mxu0 %v663
  %738 = vmatprep.subr.mxu0 0.0
  %739 = vmatpush1.msra.mxu0 %v664
  %740 = vmatprep.subr.mxu0 0.0
  %741 = vmatpush1.msra.mxu0 %v665
  %742 = vmatprep.subr.mxu0 0.0
  %743 = vmatpush1.msra.mxu0 %v666
  %744 = vmatprep.subr.mxu0 0.0
  %745 = vmatpush1.msra.mxu0 %v694
  %746 = vmatprep.subr.mxu0 0.0
  %747 = vmatpush1.msra.mxu0 0.0
  %748 = vmatprep.subr.mxu0 0.0
  %749 = vmatpush1.msra.mxu0 0.0
  %750 = vmatprep.subr.mxu0 0.0
  %751 = vmatpush1.msra.mxu0 0.0
  %752 = vmatprep.subr.mxu0 0.0
  %753 = vmatpush1.msra.mxu0 0.0
  %754 = vmatprep.subr.mxu0 0.0
  %755 = vmatpush1.msra.mxu0 0.0
  %756 = vmatprep.subr.mxu0 0.0
  %757 = vmatpush1.msra.mxu0 0.0
  %758 = vmatprep.subr.mxu0 0.0
  %759 = vmatpush1.msra.mxu0 0.0
  %760 = vmatprep.mubr.f32.mxu0 %v669
  %761 = vmatmul.mubr.f32.gmra.mrb[0].mxu0 %v587
  %v762 = vpop.f32.mrb[0].mxu0
  %v763 = vadd.f32 0.0, %v762
  %v764 = vpop.f32.mrb[0].mxu0
  %765 = vmatprep.mubr.f32.mxu0 %v672
  %766 = vmatmul.mubr.f32.gmra.mrb[0].mxu0 %v591
  %v767 = vpop.f32.mrb[0].mxu0
  %v768 = vadd.f32 0.0, %v767
  %v769 = vpop.f32.mrb[0].mxu0
  %770 = vmatprep.mubr.f32.mxu0 %v675
  %771 = vmatmul.mubr.f32.gmra.mrb[0].mxu0 %v595
  %v772 = vpop.f32.mrb[0].mxu0
  %v773 = vadd.f32 0.0, %v772
  %v774 = vpop.f32.mrb[0].mxu0
  %775 = vmatprep.mubr.f32.mxu0 %v678
  %776 = vmatmul.mubr.f32.gmra.mrb[0].mxu0 %v599
  %v777 = vpop.f32.mrb[0].mxu0
  %v778 = vadd.f32 0.0, %v777
  %v779 = vpop.f32.mrb[0].mxu0
  %780 = vmatprep.mubr.f32.mxu0 %v681
  %781 = vmatmul.mubr.f32.gmra.mrb[0].mxu0 %v603
  %v782 = vpop.f32.mrb[0].mxu0
  %v783 = vadd.f32 0.0, %v782
  %v784 = vpop.f32.mrb[0].mxu0
  %785 = vmatprep.mubr.f32.mxu0 %v684
  %786 = vmatmul.mubr.f32.gmra.mrb[0].mxu0 %v607
  %v787 = vpop.f32.mrb[0].mxu0
  %v788 = vadd.f32 0.0, %v787
  %v789 = vpop.f32.mrb[0].mxu0
  %790 = vmatprep.mubr.f32.mxu0 %v687
  %791 = vmatmul.mubr.f32.gmra.mrb[0].mxu0 %v611
  %v792 = vpop.f32.mrb[0].mxu0
  %v793 = vadd.f32 0.0, %v792
  %v794 = vpop.f32.mrb[0].mxu0
  %795 = vmatprep.mubr.f32.mxu0 %v690
  %796 = vmatmul.mubr.f32.gmra.mrb[0].mxu0 %v615
  %v797 = vpop.f32.mrb[0].mxu0
  %v798 = vadd.f32 0.0, %v797
  %v799 = vpop.f32.mrb[0].mxu0
  %800 = vdwg.mxu0
  %v801 = vmul.f32 %v763, 0.25
  %v802 = vmul.f32 %v768, 0.25
  %v803 = vmul.f32 %v773, 0.25
  %v804 = vmul.f32 %v778, 0.25
  %v805 = vmul.f32 %v783, 0.25
  %v806 = vmul.f32 %v788, 0.25
  %v807 = vmul.f32 %v793, 0.25
  %v808 = vmul.f32 %v798, 0.25
  %vm809 = vcmask 400384
  %810 = vst.msk [vmem:[%s3] sm:$0xff] %vm809, %v801
  %811 = vst.msk [vmem:[%s3 + $0x8] sm:$0xff] %vm809, %v802
  %812 = vst.msk [vmem:[%s3 + $0x10] sm:$0xff] %vm809, %v803
  %813 = vst.msk [vmem:[%s3 + $0x18] sm:$0xff] %vm809, %v804
  %814 = vst.msk [vmem:[%s3 + $0x20] sm:$0xff] %vm809, %v805
  %815 = vst.msk [vmem:[%s3 + $0x28] sm:$0xff] %vm809, %v806
  %816 = vst.msk [vmem:[%s3 + $0x30] sm:$0xff] %vm809, %v807
  %817 = vst.msk [vmem:[%s3 + $0x38] sm:$0xff] %vm809, %v808
  // Predicated region
  $region14: #{model_forward.1} parent=0 // pred_check
    _
  $region15: #{model_forward.1} parent=0 // pred_check_branch
    %819 = sbr.rel (0) target = $region17
  $region16: #{model_forward.1} parent=0 // pred_region
    _
  $region17: #{model_forward.1} parent=0 // pred_fallthru
    _
  // Predicated region
  $region18: #{model_forward.1} parent=0 // pred_check
    _
  $region19: #{model_forward.1} parent=0 // pred_check_branch
    %821 = sbr.rel (0) target = $region21
  $region20: #{model_forward.1} parent=0 // pred_region
    _
  $region21: #{model_forward.1} parent=0 // pred_fallthru
    _

</llo_original>
